<compile_context>
chip_gen: v7x
topology: tpu7x:2x2x1
jax: 0.10.0
libtpu: 0.0.40
codegen_flags: <defaults>
</compile_context>

<pallas_src>
import jax
import jax.numpy as jnp
from jax.experimental import pallas as pl
from jax.experimental.pallas import tpu as pltpu

LANE = 128  # TPU lane width: pad every trailing dim to a multiple of this.


def _round_up(v: int, m: int) -> int:
    return (v + m - 1) // m * m


def _pad2(x, rows: int, cols: int):
    r, c = x.shape
    return jnp.pad(x, ((0, rows - r), (0, cols - c)))


# ---------------------------------------------------------------------------
# Fused Pallas kernel: layer1 -> relu -> layer2, all on the MXU, single launch.
# ---------------------------------------------------------------------------
def supreme_fused_kernel(a_ref, x_ref, w1_ref, b1_ref, w2_ref, b2_ref,
                         emb_ref, out_ref):
    a = a_ref[...]                                                     # bf16 [Np, Np]

    # ---- layer 1: (A @ X) @ W1 + b1  (reordered: F_in <= F_hid => cheaper N^2 matmul)
    ax = jnp.dot(a, x_ref[...], preferred_element_type=jnp.float32)   # f32 [Np, Fi]
    x_emb = jnp.dot(ax.astype(jnp.bfloat16), w1_ref[...],
                    preferred_element_type=jnp.float32)
    x_emb = x_emb + b1_ref[...]                                        # f32 [Np, Fh]
    emb_ref[...] = x_emb

    # ---- activation (relu, f32) + dropout (eval-mode identity)
    h = jnp.maximum(x_emb, 0.0).astype(jnp.bfloat16)

    # ---- layer 2: A @ (H @ W2) + b2  (F_out <= F_hid => this order is cheaper)
    hw = jnp.dot(h, w2_ref[...], preferred_element_type=jnp.float32)   # f32 [Np, Fo]
    agg = jnp.dot(a, hw.astype(jnp.bfloat16),
                  preferred_element_type=jnp.float32)
    out_ref[...] = agg + b2_ref[...]


def _full_spec(shape):
    # Toy problem: single grid point, whole (padded, lane-dense) arrays in VMEM.
    return pl.BlockSpec(shape, lambda: tuple(0 for _ in shape))


def supreme_fused_call(a_p, x_p, w1_p, b1_p, w2_p, b2_p):
    n_p = a_p.shape[0]
    fh_p = w1_p.shape[1]
    fo_p = w2_p.shape[1]
    return pl.pallas_call(
        supreme_fused_kernel,
        out_shape=(
            jax.ShapeDtypeStruct((n_p, fh_p), jnp.float32),   # x_emb (pre-activation)
            jax.ShapeDtypeStruct((n_p, fo_p), jnp.float32),   # out
        ),
        grid=(),
        in_specs=[
            _full_spec(a_p.shape),
            _full_spec(x_p.shape),
            _full_spec(w1_p.shape),
            _full_spec(b1_p.shape),
            _full_spec(w2_p.shape),
            _full_spec(b2_p.shape),
        ],
        out_specs=(
            _full_spec((n_p, fh_p)),
            _full_spec((n_p, fo_p)),
        ),
        compiler_params=pltpu.CompilerParams(
            # headroom-safe on every chip incl. v7x (64 MiB/TC physical VMEM)
            vmem_limit_bytes=48 * 1024 * 1024,
        ),
    )(a_p, x_p, w1_p, b1_p, w2_p, b2_p)


# ---------------------------------------------------------------------------
# Glue: dense normalized adjacency (GCNConv gcn_norm with self loops).
# ---------------------------------------------------------------------------
def build_norm_adj(edge_index, edge_weight, num_nodes):
    src = edge_index[0]
    dst = edge_index[1]
    loops = jnp.arange(num_nodes, dtype=edge_index.dtype)
    src = jnp.concatenate([src, loops])
    dst = jnp.concatenate([dst, loops])
    ew = jnp.concatenate([edge_weight, jnp.ones((num_nodes,), jnp.float32)])
    deg = jnp.zeros((num_nodes,), jnp.float32).at[dst].add(ew)
    dinv = jnp.where(deg > 0, jax.lax.rsqrt(deg), 0.0)
    norm = dinv[src] * ew * dinv[dst]
    # out[dst] += norm * x[src]  <=>  A[dst, src] = norm
    a = jnp.zeros((num_nodes, num_nodes), jnp.float32).at[dst, src].add(norm)
    return a


def supreme_forward(x, edge_index, edge_weight, params):
    n, f_in = x.shape
    f_hid = params["w1"].shape[1]
    f_out = params["w2"].shape[1]

    n_p = _round_up(n, LANE)
    fi_p = _round_up(f_in, LANE)
    fh_p = _round_up(f_hid, LANE)
    fo_p = _round_up(f_out, LANE)

    a = build_norm_adj(edge_index, edge_weight, n)

    # Zero-pad to lane-dense tiles; matmul operands go to bf16, biases stay f32.
    a_p = _pad2(a, n_p, n_p).astype(jnp.bfloat16)
    x_p = _pad2(x, n_p, fi_p).astype(jnp.bfloat16)
    w1_p = _pad2(params["w1"], fi_p, fh_p).astype(jnp.bfloat16)
    w2_p = _pad2(params["w2"], fh_p, fo_p).astype(jnp.bfloat16)
    b1_p = _pad2(params["b1"], 1, fh_p).astype(jnp.float32)
    b2_p = _pad2(params["b2"], 1, fo_p).astype(jnp.float32)

    emb_p, out_p = supreme_fused_call(a_p, x_p, w1_p, b1_p, w2_p, b2_p)

    x_emb = emb_p[:n, :f_hid]
    out = out_p[:n, :f_out]
    return out, x_emb


# ---------------------------------------------------------------------------
# Pure-JAX references for correctness checks.
# ---------------------------------------------------------------------------
def supreme_reference(x, edge_index, edge_weight, params, use_bf16):
    a = build_norm_adj(edge_index, edge_weight, x.shape[0])
    if use_bf16:
        cast = lambda t: t.astype(jnp.bfloat16)
        dot = lambda p, q: jnp.dot(cast(p), cast(q),
                                   preferred_element_type=jnp.float32)
        # same contraction order as the kernel
        x_emb = dot(dot(a, x), params["w1"]) + params["b1"]
        h = jnp.maximum(x_emb, 0.0)
        out = dot(a, dot(h, params["w2"])) + params["b2"]
    else:
        x_emb = a @ (x @ params["w1"]) + params["b1"]
        h = jnp.maximum(x_emb, 0.0)
        out = a @ (h @ params["w2"]) + params["b2"]
    return out, x_emb


if __name__ == "__main__":
    # Small shapes: N=32 nodes, in_size=16, hid_size=32, out_size=8, E=64 edges.
    N, IN, HID, OUT, E = 32, 16, 32, 8, 64

    key = jax.random.PRNGKey(0)
    k_x, k_src, k_dst, k_ew, k_w1, k_w2 = jax.random.split(key, 6)

    x = jax.random.normal(k_x, (N, IN), jnp.float32)
    edge_index = jnp.stack(
        [
            jax.random.randint(k_src, (E,), 0, N),
            jax.random.randint(k_dst, (E,), 0, N),
        ]
    ).astype(jnp.int32)
    edge_weight = jax.random.uniform(k_ew, (E,), jnp.float32, 0.1, 1.0)

    # Deterministic Glorot-like parameter init (GCNConv: linear no-bias W, separate bias).
    params = {
        "w1": jax.random.normal(k_w1, (IN, HID), jnp.float32) * (1.0 / jnp.sqrt(IN)),
        "b1": jnp.zeros((1, HID), jnp.float32),
        "w2": jax.random.normal(k_w2, (HID, OUT), jnp.float32) * (1.0 / jnp.sqrt(HID)),
        "b2": jnp.zeros((1, OUT), jnp.float32),
    }

    out, x_emb = jax.jit(supreme_forward)(x, edge_index, edge_weight, params)
    jax.block_until_ready((out, x_emb))

    assert out.shape == (N, OUT) and x_emb.shape == (N, HID)
    assert out.dtype == jnp.float32 and x_emb.dtype == jnp.float32

    # Primary check: bf16-matched reference (same casts / contraction order).
    ref_out_bf, ref_emb_bf = supreme_reference(x, edge_index, edge_weight, params,
                                               use_bf16=True)
    assert jnp.allclose(x_emb, ref_emb_bf, atol=2e-3, rtol=2e-3)
    assert jnp.allclose(out, ref_out_bf, atol=2e-3, rtol=2e-3)

    # Sanity check against the full-f32 math (bf16 operand quantization slack).
    ref_out_f32, ref_emb_f32 = supreme_reference(x, edge_index, edge_weight, params,
                                                 use_bf16=False)
    assert jnp.allclose(x_emb, ref_emb_f32, atol=1e-1, rtol=1e-1)
    assert jnp.allclose(out, ref_out_f32, atol=1e-1, rtol=1e-1)

    print("KERNEL_OK")
</pallas_src>

<mosaic_0001>
module attributes {stable_mosaic.version = 11 : i64} {
  func.func private @main(%arg0: i32) attributes {dimension_semantics = [#tpu.dimension_semantics<core_parallel>], iteration_bounds = array<i64: 2>, tpu.core_type = #tpu.core_type<sc_scalar_subcore>, window_params = []} {
    return
  }
}

module attributes {stable_mosaic.version = 11 : i64} {
  func.func private @main(%arg0: i32) attributes {dimension_semantics = [#tpu.dimension_semantics<core_parallel>], iteration_bounds = array<i64: 2>, tpu.core_type = #tpu.core_type<sc_scalar_subcore>, window_params = []} {
    return
  }
}

module attributes {stable_mosaic.version = 11 : i64} {
  func.func @supreme_fused_kernel(%arg0: memref<128x128xbf16, #tpu.memory_space<vmem>>, %arg1: memref<128x128xbf16, #tpu.memory_space<vmem>>, %arg2: memref<128x128xbf16, #tpu.memory_space<vmem>>, %arg3: memref<1x128xf32, #tpu.memory_space<vmem>>, %arg4: memref<128x128xbf16, #tpu.memory_space<vmem>>, %arg5: memref<1x128xf32, #tpu.memory_space<vmem>>, %arg6: memref<128x128xf32, #tpu.memory_space<vmem>>, %arg7: memref<128x128xf32, #tpu.memory_space<vmem>>) attributes {dimension_semantics = [], scalar_prefetch = 0 : i64, scratch_operands = 0 : i64, tpu.core_type = #tpu.core_type<tc>} {
    %c0 = arith.constant 0 : index
    %c0_0 = arith.constant 0 : index
    %0 = vector.load %arg0[%c0, %c0_0] : memref<128x128xbf16, #tpu.memory_space<vmem>>, vector<128x128xbf16>
    %c0_1 = arith.constant 0 : index
    %c0_2 = arith.constant 0 : index
    %1 = vector.load %arg1[%c0_1, %c0_2] : memref<128x128xbf16, #tpu.memory_space<vmem>>, vector<128x128xbf16>
    %cst = arith.constant dense<0.000000e+00> : vector<128x128xf32>
    %2 = tpu.matmul %0, %1, %cst {dimension_numbers = #tpu.dot_dimension_numbers<[1], [0], [0], [1], [0, 0, 1, 1], [], []>} : vector<128x128xbf16>, vector<128x128xbf16>, vector<128x128xf32> -> vector<128x128xf32>
    %3 = arith.truncf %2 : vector<128x128xf32> to vector<128x128xbf16>
    %c0_3 = arith.constant 0 : index
    %c0_4 = arith.constant 0 : index
    %4 = vector.load %arg2[%c0_3, %c0_4] : memref<128x128xbf16, #tpu.memory_space<vmem>>, vector<128x128xbf16>
    %cst_5 = arith.constant dense<0.000000e+00> : vector<128x128xf32>
    %5 = tpu.matmul %3, %4, %cst_5 {dimension_numbers = #tpu.dot_dimension_numbers<[1], [0], [0], [1], [0, 0, 1, 1], [], []>} : vector<128x128xbf16>, vector<128x128xbf16>, vector<128x128xf32> -> vector<128x128xf32>
    %c0_6 = arith.constant 0 : index
    %c0_7 = arith.constant 0 : index
    %6 = vector.load %arg3[%c0_6, %c0_7] : memref<1x128xf32, #tpu.memory_space<vmem>>, vector<1x128xf32>
    %7 = vector.broadcast %6 : vector<1x128xf32> to vector<128x128xf32>
    %8 = arith.addf %5, %7 : vector<128x128xf32>
    %c0_8 = arith.constant 0 : index
    %c0_9 = arith.constant 0 : index
    %9 = vector.load %arg6[%c0_8, %c0_9] : memref<128x128xf32, #tpu.memory_space<vmem>>, vector<128x128xf32>
    tpu.vector_store %arg6[%c0_8, %c0_9], %8 {strides = array<i32>} : memref<128x128xf32, #tpu.memory_space<vmem>>, vector<128x128xf32>,
    %cst_10 = arith.constant 0.000000e+00 : f32
    %10 = vector.broadcast %cst_10 : f32 to vector<128x128xf32>
    %11 = arith.maximumf %8, %10 : vector<128x128xf32>
    %12 = arith.truncf %11 : vector<128x128xf32> to vector<128x128xbf16>
    %c0_11 = arith.constant 0 : index
    %c0_12 = arith.constant 0 : index
    %13 = vector.load %arg4[%c0_11, %c0_12] : memref<128x128xbf16, #tpu.memory_space<vmem>>, vector<128x128xbf16>
    %cst_13 = arith.constant dense<0.000000e+00> : vector<128x128xf32>
    %14 = tpu.matmul %12, %13, %cst_13 {dimension_numbers = #tpu.dot_dimension_numbers<[1], [0], [0], [1], [0, 0, 1, 1], [], []>} : vector<128x128xbf16>, vector<128x128xbf16>, vector<128x128xf32> -> vector<128x128xf32>
    %15 = arith.truncf %14 : vector<128x128xf32> to vector<128x128xbf16>
    %cst_14 = arith.constant dense<0.000000e+00> : vector<128x128xf32>
    %16 = tpu.matmul %0, %15, %cst_14 {dimension_numbers = #tpu.dot_dimension_numbers<[1], [0], [0], [1], [0, 0, 1, 1], [], []>} : vector<128x128xbf16>, vector<128x128xbf16>, vector<128x128xf32> -> vector<128x128xf32>
    %c0_15 = arith.constant 0 : index
    %c0_16 = arith.constant 0 : index
    %17 = vector.load %arg5[%c0_15, %c0_16] : memref<1x128xf32, #tpu.memory_space<vmem>>, vector<1x128xf32>
    %18 = vector.broadcast %17 : vector<1x128xf32> to vector<128x128xf32>
    %19 = arith.addf %16, %18 : vector<128x128xf32>
    %c0_17 = arith.constant 0 : index
    %c0_18 = arith.constant 0 : index
    %20 = vector.load %arg7[%c0_17, %c0_18] : memref<128x128xf32, #tpu.memory_space<vmem>>, vector<128x128xf32>
    tpu.vector_store %arg7[%c0_17, %c0_18], %19 {strides = array<i32>} : memref<128x128xf32, #tpu.memory_space<vmem>>, vector<128x128xf32>,
    return
  }
}

</mosaic_0001>

<llo_original>
// kernel: supreme_forward.1
$region0: #{supreme_forward.1}
  #allocation0 [shape = 'u32[]', space=smem, size = 0x4, offset = 0x4, fixed_abs, tag = 'smem constant byte address 0x4 - core index']
  #allocation1 [shape = 'u32[144,128]{1,0:T(1,128)}', space=vmem, size = 0x12000, scoped, tag = 'internal scratch']
  %s0 = inlined_call_operand.vmem [shape: bf16[128,128], index: 0, kind: input, shape index: {}]
  %s1 = inlined_call_operand.vmem [shape: bf16[128,128], index: 1, kind: input, shape index: {}]
  %s2 = inlined_call_operand.vmem [shape: bf16[128,128], index: 2, kind: input, shape index: {}]
  %s3 = inlined_call_operand.vmem [shape: f32[1,128], index: 3, kind: input, shape index: {}]
  %s4 = inlined_call_operand.vmem [shape: bf16[128,128], index: 4, kind: input, shape index: {}]
  %s5 = inlined_call_operand.vmem [shape: f32[1,128], index: 5, kind: input, shape index: {}]
  %s6 = inlined_call_operand.vmem [shape: f32[128,128], index: 6, kind: output, shape index: {0}]
  %s7 = inlined_call_operand.vmem [shape: f32[128,128], index: 7, kind: output, shape index: {1}]
  %8 = xla_tuple %s6, %s7
  %s9 = sld [smem:[#allocation0]]
  $region42: #{supreme_forward.1} parent=0
    _
  %s11 = ssub.s32 1, %s9
  %s12 = scalar_select 0, %s11, %s9
  // Predicated region
  $region2: #{supreme_forward.1} parent=0 // pred_check
    _
  $region3: #{supreme_forward.1} parent=0 // pred_check_branch
    %14 = sbr.rel (0) target = $region5
  $region4: #{supreme_forward.1} parent=0 // pred_region
    _
  $region5: #{supreme_forward.1} parent=0 // pred_fallthru
    _
  // Predicated region
  $region6: #{supreme_forward.1} parent=0 // pred_check
    _
  $region7: #{supreme_forward.1} parent=0 // pred_check_branch
    %16 = sbr.rel (0) target = $region9
  $region8: #{supreme_forward.1} parent=0 // pred_region
    _
  $region9: #{supreme_forward.1} parent=0 // pred_fallthru
    _
  // Predicated region
  $region10: #{supreme_forward.1} parent=0 // pred_check
    _
  $region11: #{supreme_forward.1} parent=0 // pred_check_branch
    %18 = sbr.rel (0) target = $region13
  $region12: #{supreme_forward.1} parent=0 // pred_region
    _
  $region13: #{supreme_forward.1} parent=0 // pred_fallthru
    _
  // Predicated region
  $region14: #{supreme_forward.1} parent=0 // pred_check
    _
  $region15: #{supreme_forward.1} parent=0 // pred_check_branch
    %20 = sbr.rel (0) target = $region17
  $region16: #{supreme_forward.1} parent=0 // pred_region
    _
  $region17: #{supreme_forward.1} parent=0 // pred_fallthru
    _
  // Predicated region
  $region18: #{supreme_forward.1} parent=0 // pred_check
    _
  $region19: #{supreme_forward.1} parent=0 // pred_check_branch
    %22 = sbr.rel (0) target = $region21
  $region20: #{supreme_forward.1} parent=0 // pred_region
    _
  $region21: #{supreme_forward.1} parent=0 // pred_fallthru
    _
  // Predicated region
  $region22: #{supreme_forward.1} parent=0 // pred_check
    _
  $region23: #{supreme_forward.1} parent=0 // pred_check_branch
    %24 = sbr.rel (0) target = $region25
  $region24: #{supreme_forward.1} parent=0 // pred_region
    _
  $region25: #{supreme_forward.1} parent=0 // pred_fallthru
    _
  %v26 = vld [vmem:[%s0] sm:$0xf]
  %v27 = vld [vmem:[%s0 + $0x4] sm:$0xf]
  %v28 = vld [vmem:[%s0 + $0x8] sm:$0xf]
  %v29 = vld [vmem:[%s0 + $0xc] sm:$0xf]
  %v30 = vld [vmem:[%s0 + $0x10] sm:$0xf]
  %v31 = vld [vmem:[%s0 + $0x14] sm:$0xf]
  %v32 = vld [vmem:[%s0 + $0x18] sm:$0xf]
  %v33 = vld [vmem:[%s0 + $0x1c] sm:$0xf]
  %v34 = vld [vmem:[%s0 + $0x20] sm:$0xf]
  %v35 = vld [vmem:[%s0 + $0x24] sm:$0xf]
  %v36 = vld [vmem:[%s0 + $0x28] sm:$0xf]
  %v37 = vld [vmem:[%s0 + $0x2c] sm:$0xf]
  %v38 = vld [vmem:[%s0 + $0x30] sm:$0xf]
  %v39 = vld [vmem:[%s0 + $0x34] sm:$0xf]
  %v40 = vld [vmem:[%s0 + $0x38] sm:$0xf]
  %v41 = vld [vmem:[%s0 + $0x3c] sm:$0xf]
  %v42 = vld [vmem:[%s1] sm:$0xf]
  %v43 = vld [vmem:[%s1 + $0x4] sm:$0xf]
  %v44 = vld [vmem:[%s1 + $0x8] sm:$0xf]
  %v45 = vld [vmem:[%s1 + $0xc] sm:$0xf]
  %v46 = vld [vmem:[%s1 + $0x10] sm:$0xf]
  %v47 = vld [vmem:[%s1 + $0x14] sm:$0xf]
  %v48 = vld [vmem:[%s1 + $0x18] sm:$0xf]
  %v49 = vld [vmem:[%s1 + $0x1c] sm:$0xf]
  %v50 = vld [vmem:[%s1 + $0x20] sm:$0xf]
  %v51 = vld [vmem:[%s1 + $0x24] sm:$0xf]
  %v52 = vld [vmem:[%s1 + $0x28] sm:$0xf]
  %v53 = vld [vmem:[%s1 + $0x2c] sm:$0xf]
  %v54 = vld [vmem:[%s1 + $0x30] sm:$0xf]
  %v55 = vld [vmem:[%s1 + $0x34] sm:$0xf]
  %v56 = vld [vmem:[%s1 + $0x38] sm:$0xf]
  %v57 = vld [vmem:[%s1 + $0x3c] sm:$0xf]
  %v74 = vunpack.c.l.b16 %v26
  %v75 = vunpack.c.l.b16 %v27
  %v76 = vunpack.c.l.b16 %v28
  %v77 = vunpack.c.l.b16 %v29
  %v78 = vunpack.c.l.b16 %v30
  %v79 = vunpack.c.l.b16 %v31
  %v80 = vunpack.c.l.b16 %v32
  %v81 = vunpack.c.l.b16 %v33
  %v82 = vunpack.c.l.b16 %v34
  %v83 = vunpack.c.l.b16 %v35
  %v84 = vunpack.c.l.b16 %v36
  %v85 = vunpack.c.l.b16 %v37
  %v86 = vunpack.c.l.b16 %v38
  %v87 = vunpack.c.l.b16 %v39
  %v88 = vunpack.c.l.b16 %v40
  %v89 = vunpack.c.l.b16 %v41
  %v90 = vpack.c.b16 %v75, %v74
  %v91 = vpack.c.b16 %v77, %v76
  %v92 = vpack.c.b16 %v79, %v78
  %v93 = vpack.c.b16 %v81, %v80
  %v94 = vpack.c.b16 %v83, %v82
  %v95 = vpack.c.b16 %v85, %v84
  %v96 = vpack.c.b16 %v87, %v86
  %v97 = vpack.c.b16 %v89, %v88
  %v122 = vunpack.c.l.b16 %v42
  %v123 = vunpack.c.l.b16 %v43
  %v124 = vunpack.c.l.b16 %v44
  %v125 = vunpack.c.l.b16 %v45
  %v126 = vunpack.c.l.b16 %v46
  %v127 = vunpack.c.l.b16 %v47
  %v128 = vunpack.c.l.b16 %v48
  %v129 = vunpack.c.l.b16 %v49
  %v130 = vunpack.c.l.b16 %v50
  %v131 = vunpack.c.l.b16 %v51
  %v132 = vunpack.c.l.b16 %v52
  %v133 = vunpack.c.l.b16 %v53
  %v134 = vunpack.c.l.b16 %v54
  %v135 = vunpack.c.l.b16 %v55
  %v136 = vunpack.c.l.b16 %v56
  %v137 = vunpack.c.l.b16 %v57
  %v138 = vpack.c.b16 %v123, %v122
  %v139 = vpack.c.b16 %v125, %v124
  %v140 = vpack.c.b16 %v127, %v126
  %v141 = vpack.c.b16 %v129, %v128
  %v142 = vpack.c.b16 %v131, %v130
  %v143 = vpack.c.b16 %v133, %v132
  %v144 = vpack.c.b16 %v135, %v134
  %v145 = vpack.c.b16 %v137, %v136
  %154 = vmatprep.subr.bf16.mxu0 0
  %155 = vmatpush1.bf16.msra.mxu0 %v138
  %156 = vmatprep.subr.bf16.mxu0 0
  %157 = vmatpush1.bf16.msra.mxu0 %v139
  %158 = vmatprep.subr.bf16.mxu0 0
  %159 = vmatpush1.bf16.msra.mxu0 %v140
  %160 = vmatprep.subr.bf16.mxu0 0
  %161 = vmatpush1.bf16.msra.mxu0 %v141
  %162 = vmatprep.subr.bf16.mxu0 0
  %163 = vmatpush1.bf16.msra.mxu0 %v142
  %164 = vmatprep.subr.bf16.mxu0 0
  %165 = vmatpush1.bf16.msra.mxu0 %v143
  %166 = vmatprep.subr.bf16.mxu0 0
  %167 = vmatpush1.bf16.msra.mxu0 %v144
  %168 = vmatprep.subr.bf16.mxu0 0
  %169 = vmatpush1.bf16.msra.mxu0 %v145
  %170 = vmatprep.subr.bf16.mxu0 0
  %171 = vmatpush1.bf16.msra.mxu0 0
  %172 = vmatprep.subr.bf16.mxu0 0
  %173 = vmatpush1.bf16.msra.mxu0 0
  %174 = vmatprep.subr.bf16.mxu0 0
  %175 = vmatpush1.bf16.msra.mxu0 0
  %176 = vmatprep.subr.bf16.mxu0 0
  %177 = vmatpush1.bf16.msra.mxu0 0
  %178 = vmatprep.subr.bf16.mxu0 0
  %179 = vmatpush1.bf16.msra.mxu0 0
  %180 = vmatprep.subr.bf16.mxu0 0
  %181 = vmatpush1.bf16.msra.mxu0 0
  %182 = vmatprep.subr.bf16.mxu0 0
  %183 = vmatpush1.bf16.msra.mxu0 0
  %184 = vmatprep.subr.bf16.mxu0 0
  %185 = vmatpush1.bf16.msra.mxu0 0
  %186 = vmatprep.mubr.bf16.mxu0 0
  %187 = vmatmul.mubr.bf16.gmra.mrb[0].mxu0 %v90
  %v188 = vpop.f32.mrb[0].mxu0
  %v189 = vadd.f32 0.0, %v188
  %v190 = vpop.f32.mrb[0].mxu0
  %v191 = vpop.f32.mrb[0].mxu0
  %v192 = vadd.f32 0.0, %v191
  %v193 = vpop.f32.mrb[0].mxu0
  %194 = vmatprep.mubr.bf16.mxu0 0
  %195 = vmatmul.mubr.bf16.gmra.mrb[0].mxu0 %v91
  %v196 = vpop.f32.mrb[0].mxu0
  %v197 = vadd.f32 0.0, %v196
  %v198 = vpop.f32.mrb[0].mxu0
  %v199 = vpop.f32.mrb[0].mxu0
  %v200 = vadd.f32 0.0, %v199
  %v201 = vpop.f32.mrb[0].mxu0
  %202 = vmatprep.mubr.bf16.mxu0 0
  %203 = vmatmul.mubr.bf16.gmra.mrb[0].mxu0 %v92
  %v204 = vpop.f32.mrb[0].mxu0
  %v205 = vadd.f32 0.0, %v204
  %v206 = vpop.f32.mrb[0].mxu0
  %v207 = vpop.f32.mrb[0].mxu0
  %v208 = vadd.f32 0.0, %v207
  %v209 = vpop.f32.mrb[0].mxu0
  %210 = vmatprep.mubr.bf16.mxu0 0
  %211 = vmatmul.mubr.bf16.gmra.mrb[0].mxu0 %v93
  %v212 = vpop.f32.mrb[0].mxu0
  %v213 = vadd.f32 0.0, %v212
  %v214 = vpop.f32.mrb[0].mxu0
  %v215 = vpop.f32.mrb[0].mxu0
  %v216 = vadd.f32 0.0, %v215
  %v217 = vpop.f32.mrb[0].mxu0
  %218 = vmatprep.mubr.bf16.mxu0 0
  %219 = vmatmul.mubr.bf16.gmra.mrb[0].mxu0 %v94
  %v220 = vpop.f32.mrb[0].mxu0
  %v221 = vadd.f32 0.0, %v220
  %v222 = vpop.f32.mrb[0].mxu0
  %v223 = vpop.f32.mrb[0].mxu0
  %v224 = vadd.f32 0.0, %v223
  %v225 = vpop.f32.mrb[0].mxu0
  %226 = vmatprep.mubr.bf16.mxu0 0
  %227 = vmatmul.mubr.bf16.gmra.mrb[0].mxu0 %v95
  %v228 = vpop.f32.mrb[0].mxu0
  %v229 = vadd.f32 0.0, %v228
  %v230 = vpop.f32.mrb[0].mxu0
  %v231 = vpop.f32.mrb[0].mxu0
  %v232 = vadd.f32 0.0, %v231
  %v233 = vpop.f32.mrb[0].mxu0
  %234 = vmatprep.mubr.bf16.mxu0 0
  %235 = vmatmul.mubr.bf16.gmra.mrb[0].mxu0 %v96
  %v236 = vpop.f32.mrb[0].mxu0
  %v237 = vadd.f32 0.0, %v236
  %v238 = vpop.f32.mrb[0].mxu0
  %v239 = vpop.f32.mrb[0].mxu0
  %v240 = vadd.f32 0.0, %v239
  %v241 = vpop.f32.mrb[0].mxu0
  %242 = vmatprep.mubr.bf16.mxu0 0
  %243 = vmatmul.mubr.bf16.gmra.mrb[0].mxu0 %v97
  %v244 = vpop.f32.mrb[0].mxu0
  %v245 = vadd.f32 0.0, %v244
  %v246 = vpop.f32.mrb[0].mxu0
  %v247 = vpop.f32.mrb[0].mxu0
  %v248 = vadd.f32 0.0, %v247
  %v249 = vpop.f32.mrb[0].mxu0
  %250 = vdwg.mxu0
  %v251 = vpack.c.bf16 %v192, %v189
  %v252 = vpack.c.bf16 %v200, %v197
  %v253 = vpack.c.bf16 %v208, %v205
  %v254 = vpack.c.bf16 %v216, %v213
  %v255 = vpack.c.bf16 %v224, %v221
  %v256 = vpack.c.bf16 %v232, %v229
  %v257 = vpack.c.bf16 %v240, %v237
  %v258 = vpack.c.bf16 %v248, %v245
  %v259 = vld [vmem:[%s2] sm:$0xf]
  %v260 = vld [vmem:[%s2 + $0x4] sm:$0xf]
  %v261 = vld [vmem:[%s2 + $0x8] sm:$0xf]
  %v262 = vld [vmem:[%s2 + $0xc] sm:$0xf]
  %v263 = vld [vmem:[%s2 + $0x10] sm:$0xf]
  %v264 = vld [vmem:[%s2 + $0x14] sm:$0xf]
  %v265 = vld [vmem:[%s2 + $0x18] sm:$0xf]
  %v266 = vld [vmem:[%s2 + $0x1c] sm:$0xf]
  %v267 = vld [vmem:[%s2 + $0x20] sm:$0xf]
  %v268 = vld [vmem:[%s2 + $0x24] sm:$0xf]
  %v269 = vld [vmem:[%s2 + $0x28] sm:$0xf]
  %v270 = vld [vmem:[%s2 + $0x2c] sm:$0xf]
  %v271 = vld [vmem:[%s2 + $0x30] sm:$0xf]
  %v272 = vld [vmem:[%s2 + $0x34] sm:$0xf]
  %v273 = vld [vmem:[%s2 + $0x38] sm:$0xf]
  %v274 = vld [vmem:[%s2 + $0x3c] sm:$0xf]
  %v275 = vld [vmem:[%s3] sm:$0x1]
  %v277 = vlaneseq
  %v278 = vshrl.u32 %v277, 7
  %v279 = vsub.s32 0, %v278
  %v280 = vrot.slane %v275, %v279
  %v298 = vunpack.c.l.b16 %v259
  %v299 = vunpack.c.l.b16 %v260
  %v300 = vunpack.c.l.b16 %v261
  %v301 = vunpack.c.l.b16 %v262
  %v302 = vunpack.c.l.b16 %v263
  %v303 = vunpack.c.l.b16 %v264
  %v304 = vunpack.c.l.b16 %v265
  %v305 = vunpack.c.l.b16 %v266
  %v306 = vunpack.c.l.b16 %v267
  %v307 = vunpack.c.l.b16 %v268
  %v308 = vunpack.c.l.b16 %v269
  %v309 = vunpack.c.l.b16 %v270
  %v310 = vunpack.c.l.b16 %v271
  %v311 = vunpack.c.l.b16 %v272
  %v312 = vunpack.c.l.b16 %v273
  %v313 = vunpack.c.l.b16 %v274
  %v314 = vpack.c.b16 %v299, %v298
  %v315 = vpack.c.b16 %v301, %v300
  %v316 = vpack.c.b16 %v303, %v302
  %v317 = vpack.c.b16 %v305, %v304
  %v318 = vpack.c.b16 %v307, %v306
  %v319 = vpack.c.b16 %v309, %v308
  %v320 = vpack.c.b16 %v311, %v310
  %v321 = vpack.c.b16 %v313, %v312
  %330 = vmatprep.subr.bf16.mxu0 0
  %331 = vmatpush1.bf16.msra.mxu0 %v314
  %332 = vmatprep.subr.bf16.mxu0 0
  %333 = vmatpush1.bf16.msra.mxu0 %v315
  %334 = vmatprep.subr.bf16.mxu0 0
  %335 = vmatpush1.bf16.msra.mxu0 %v316
  %336 = vmatprep.subr.bf16.mxu0 0
  %337 = vmatpush1.bf16.msra.mxu0 %v317
  %338 = vmatprep.subr.bf16.mxu0 0
  %339 = vmatpush1.bf16.msra.mxu0 %v318
  %340 = vmatprep.subr.bf16.mxu0 0
  %341 = vmatpush1.bf16.msra.mxu0 %v319
  %342 = vmatprep.subr.bf16.mxu0 0
  %343 = vmatpush1.bf16.msra.mxu0 %v320
  %344 = vmatprep.subr.bf16.mxu0 0
  %345 = vmatpush1.bf16.msra.mxu0 %v321
  %346 = vmatprep.subr.bf16.mxu0 0
  %347 = vmatpush1.bf16.msra.mxu0 0
  %348 = vmatprep.subr.bf16.mxu0 0
  %349 = vmatpush1.bf16.msra.mxu0 0
  %350 = vmatprep.subr.bf16.mxu0 0
  %351 = vmatpush1.bf16.msra.mxu0 0
  %352 = vmatprep.subr.bf16.mxu0 0
  %353 = vmatpush1.bf16.msra.mxu0 0
  %354 = vmatprep.subr.bf16.mxu0 0
  %355 = vmatpush1.bf16.msra.mxu0 0
  %356 = vmatprep.subr.bf16.mxu0 0
  %357 = vmatpush1.bf16.msra.mxu0 0
  %358 = vmatprep.subr.bf16.mxu0 0
  %359 = vmatpush1.bf16.msra.mxu0 0
  %360 = vmatprep.subr.bf16.mxu0 0
  %361 = vmatpush1.bf16.msra.mxu0 0
  %362 = vmatprep.mubr.bf16.mxu0 0
  %363 = vmatmul.mubr.bf16.gmra.mrb[0].mxu0 %v251
  %v364 = vpop.f32.mrb[0].mxu0
  %v365 = vadd.f32 %v280, %v364
  %v366 = vpop.f32.mrb[0].mxu0
  %v367 = vpop.f32.mrb[0].mxu0
  %v368 = vadd.f32 %v280, %v367
  %v369 = vpop.f32.mrb[0].mxu0
  %370 = vmatprep.mubr.bf16.mxu0 0
  %371 = vmatmul.mubr.bf16.gmra.mrb[0].mxu0 %v252
  %v372 = vpop.f32.mrb[0].mxu0
  %v373 = vadd.f32 %v280, %v372
  %v374 = vpop.f32.mrb[0].mxu0
  %v375 = vpop.f32.mrb[0].mxu0
  %v376 = vadd.f32 %v280, %v375
  %v377 = vpop.f32.mrb[0].mxu0
  %378 = vmatprep.mubr.bf16.mxu0 0
  %379 = vmatmul.mubr.bf16.gmra.mrb[0].mxu0 %v253
  %v380 = vpop.f32.mrb[0].mxu0
  %v381 = vadd.f32 %v280, %v380
  %v382 = vpop.f32.mrb[0].mxu0
  %v383 = vpop.f32.mrb[0].mxu0
  %v384 = vadd.f32 %v280, %v383
  %v385 = vpop.f32.mrb[0].mxu0
  %386 = vmatprep.mubr.bf16.mxu0 0
  %387 = vmatmul.mubr.bf16.gmra.mrb[0].mxu0 %v254
  %v388 = vpop.f32.mrb[0].mxu0
  %v389 = vadd.f32 %v280, %v388
  %v390 = vpop.f32.mrb[0].mxu0
  %v391 = vpop.f32.mrb[0].mxu0
  %v392 = vadd.f32 %v280, %v391
  %v393 = vpop.f32.mrb[0].mxu0
  %394 = vmatprep.mubr.bf16.mxu0 0
  %395 = vmatmul.mubr.bf16.gmra.mrb[0].mxu0 %v255
  %v396 = vpop.f32.mrb[0].mxu0
  %v397 = vadd.f32 %v280, %v396
  %v398 = vpop.f32.mrb[0].mxu0
  %v399 = vpop.f32.mrb[0].mxu0
  %v400 = vadd.f32 %v280, %v399
  %v401 = vpop.f32.mrb[0].mxu0
  %402 = vmatprep.mubr.bf16.mxu0 0
  %403 = vmatmul.mubr.bf16.gmra.mrb[0].mxu0 %v256
  %v404 = vpop.f32.mrb[0].mxu0
  %v405 = vadd.f32 %v280, %v404
  %v406 = vpop.f32.mrb[0].mxu0
  %v407 = vpop.f32.mrb[0].mxu0
  %v408 = vadd.f32 %v280, %v407
  %v409 = vpop.f32.mrb[0].mxu0
  %410 = vmatprep.mubr.bf16.mxu0 0
  %411 = vmatmul.mubr.bf16.gmra.mrb[0].mxu0 %v257
  %v412 = vpop.f32.mrb[0].mxu0
  %v413 = vadd.f32 %v280, %v412
  %v414 = vpop.f32.mrb[0].mxu0
  %v415 = vpop.f32.mrb[0].mxu0
  %v416 = vadd.f32 %v280, %v415
  %v417 = vpop.f32.mrb[0].mxu0
  %418 = vmatprep.mubr.bf16.mxu0 0
  %419 = vmatmul.mubr.bf16.gmra.mrb[0].mxu0 %v258
  %v420 = vpop.f32.mrb[0].mxu0
  %v421 = vadd.f32 %v280, %v420
  %v422 = vpop.f32.mrb[0].mxu0
  %v423 = vpop.f32.mrb[0].mxu0
  %v424 = vadd.f32 %v280, %v423
  %v425 = vpop.f32.mrb[0].mxu0
  %426 = vdwg.mxu0
  %427 = vst [vmem:[%s6] sm:$0xff] %v365
  %428 = vst [vmem:[%s6 + $0x8] sm:$0xff] %v368
  %429 = vst [vmem:[%s6 + $0x10] sm:$0xff] %v373
  %430 = vst [vmem:[%s6 + $0x18] sm:$0xff] %v376
  %431 = vst [vmem:[%s6 + $0x20] sm:$0xff] %v381
  %432 = vst [vmem:[%s6 + $0x28] sm:$0xff] %v384
  %433 = vst [vmem:[%s6 + $0x30] sm:$0xff] %v389
  %434 = vst [vmem:[%s6 + $0x38] sm:$0xff] %v392
  %435 = vst [vmem:[%s6 + $0x40] sm:$0xff] %v397
  %436 = vst [vmem:[%s6 + $0x48] sm:$0xff] %v400
  %437 = vst [vmem:[%s6 + $0x50] sm:$0xff] %v405
  %438 = vst [vmem:[%s6 + $0x58] sm:$0xff] %v408
  %439 = vst [vmem:[%s6 + $0x60] sm:$0xff] %v413
  %440 = vst [vmem:[%s6 + $0x68] sm:$0xff] %v416
  %441 = vst [vmem:[%s6 + $0x70] sm:$0xff] %v421
  %442 = vst [vmem:[%s6 + $0x78] sm:$0xff] %v424
  %v443 = vmax.f32 %v365, 0.0
  %v444 = vmax.f32 %v368, 0.0
  %v445 = vmax.f32 %v373, 0.0
  %v446 = vmax.f32 %v376, 0.0
  %v447 = vmax.f32 %v381, 0.0
  %v448 = vmax.f32 %v384, 0.0
  %v449 = vmax.f32 %v389, 0.0
  %v450 = vmax.f32 %v392, 0.0
  %v451 = vmax.f32 %v397, 0.0
  %v452 = vmax.f32 %v400, 0.0
  %v453 = vmax.f32 %v405, 0.0
  %v454 = vmax.f32 %v408, 0.0
  %v455 = vmax.f32 %v413, 0.0
  %v456 = vmax.f32 %v416, 0.0
  %v457 = vmax.f32 %v421, 0.0
  %v458 = vmax.f32 %v424, 0.0
  %v459 = vpack.c.bf16 %v444, %v443
  %v460 = vpack.c.bf16 %v446, %v445
  %v461 = vpack.c.bf16 %v448, %v447
  %v462 = vpack.c.bf16 %v450, %v449
  %v463 = vpack.c.bf16 %v452, %v451
  %v464 = vpack.c.bf16 %v454, %v453
  %v465 = vpack.c.bf16 %v456, %v455
  %v466 = vpack.c.bf16 %v458, %v457
  %v467 = vld [vmem:[%s4] sm:$0xf]
  %v468 = vld [vmem:[%s4 + $0x4] sm:$0xf]
  %v469 = vld [vmem:[%s4 + $0x8] sm:$0xf]
  %v470 = vld [vmem:[%s4 + $0xc] sm:$0xf]
  %v471 = vld [vmem:[%s4 + $0x10] sm:$0xf]
  %v472 = vld [vmem:[%s4 + $0x14] sm:$0xf]
  %v473 = vld [vmem:[%s4 + $0x18] sm:$0xf]
  %v474 = vld [vmem:[%s4 + $0x1c] sm:$0xf]
  %v475 = vld [vmem:[%s4 + $0x20] sm:$0xf]
  %v476 = vld [vmem:[%s4 + $0x24] sm:$0xf]
  %v477 = vld [vmem:[%s4 + $0x28] sm:$0xf]
  %v478 = vld [vmem:[%s4 + $0x2c] sm:$0xf]
  %v479 = vld [vmem:[%s4 + $0x30] sm:$0xf]
  %v480 = vld [vmem:[%s4 + $0x34] sm:$0xf]
  %v481 = vld [vmem:[%s4 + $0x38] sm:$0xf]
  %v482 = vld [vmem:[%s4 + $0x3c] sm:$0xf]
  %v499 = vunpack.c.l.b16 %v467
  %v500 = vunpack.c.l.b16 %v468
  %v501 = vunpack.c.l.b16 %v469
  %v502 = vunpack.c.l.b16 %v470
  %v503 = vunpack.c.l.b16 %v471
  %v504 = vunpack.c.l.b16 %v472
  %v505 = vunpack.c.l.b16 %v473
  %v506 = vunpack.c.l.b16 %v474
  %v507 = vunpack.c.l.b16 %v475
  %v508 = vunpack.c.l.b16 %v476
  %v509 = vunpack.c.l.b16 %v477
  %v510 = vunpack.c.l.b16 %v478
  %v511 = vunpack.c.l.b16 %v479
  %v512 = vunpack.c.l.b16 %v480
  %v513 = vunpack.c.l.b16 %v481
  %v514 = vunpack.c.l.b16 %v482
  %v515 = vpack.c.b16 %v500, %v499
  %v516 = vpack.c.b16 %v502, %v501
  %v517 = vpack.c.b16 %v504, %v503
  %v518 = vpack.c.b16 %v506, %v505
  %v519 = vpack.c.b16 %v508, %v507
  %v520 = vpack.c.b16 %v510, %v509
  %v521 = vpack.c.b16 %v512, %v511
  %v522 = vpack.c.b16 %v514, %v513
  %531 = vmatprep.subr.bf16.mxu0 0
  %532 = vmatpush1.bf16.msra.mxu0 %v515
  %533 = vmatprep.subr.bf16.mxu0 0
  %534 = vmatpush1.bf16.msra.mxu0 %v516
  %535 = vmatprep.subr.bf16.mxu0 0
  %536 = vmatpush1.bf16.msra.mxu0 %v517
  %537 = vmatprep.subr.bf16.mxu0 0
  %538 = vmatpush1.bf16.msra.mxu0 %v518
  %539 = vmatprep.subr.bf16.mxu0 0
  %540 = vmatpush1.bf16.msra.mxu0 %v519
  %541 = vmatprep.subr.bf16.mxu0 0
  %542 = vmatpush1.bf16.msra.mxu0 %v520
  %543 = vmatprep.subr.bf16.mxu0 0
  %544 = vmatpush1.bf16.msra.mxu0 %v521
  %545 = vmatprep.subr.bf16.mxu0 0
  %546 = vmatpush1.bf16.msra.mxu0 %v522
  %547 = vmatprep.subr.bf16.mxu0 0
  %548 = vmatpush1.bf16.msra.mxu0 0
  %549 = vmatprep.subr.bf16.mxu0 0
  %550 = vmatpush1.bf16.msra.mxu0 0
  %551 = vmatprep.subr.bf16.mxu0 0
  %552 = vmatpush1.bf16.msra.mxu0 0
  %553 = vmatprep.subr.bf16.mxu0 0
  %554 = vmatpush1.bf16.msra.mxu0 0
  %555 = vmatprep.subr.bf16.mxu0 0
  %556 = vmatpush1.bf16.msra.mxu0 0
  %557 = vmatprep.subr.bf16.mxu0 0
  %558 = vmatpush1.bf16.msra.mxu0 0
  %559 = vmatprep.subr.bf16.mxu0 0
  %560 = vmatpush1.bf16.msra.mxu0 0
  %561 = vmatprep.subr.bf16.mxu0 0
  %562 = vmatpush1.bf16.msra.mxu0 0
  %563 = vmatprep.mubr.bf16.mxu0 0
  %564 = vmatmul.mubr.bf16.gmra.mrb[0].mxu0 %v459
  %v565 = vpop.f32.mrb[0].mxu0
  %v566 = vadd.f32 0.0, %v565
  %v567 = vpop.f32.mrb[0].mxu0
  %v568 = vpop.f32.mrb[0].mxu0
  %v569 = vadd.f32 0.0, %v568
  %v570 = vpop.f32.mrb[0].mxu0
  %571 = vmatprep.mubr.bf16.mxu0 0
  %572 = vmatmul.mubr.bf16.gmra.mrb[0].mxu0 %v460
  %v573 = vpop.f32.mrb[0].mxu0
  %v574 = vadd.f32 0.0, %v573
  %v575 = vpop.f32.mrb[0].mxu0
  %v576 = vpop.f32.mrb[0].mxu0
  %v577 = vadd.f32 0.0, %v576
  %v578 = vpop.f32.mrb[0].mxu0
  %579 = vmatprep.mubr.bf16.mxu0 0
  %580 = vmatmul.mubr.bf16.gmra.mrb[0].mxu0 %v461
  %v581 = vpop.f32.mrb[0].mxu0
  %v582 = vadd.f32 0.0, %v581
  %v583 = vpop.f32.mrb[0].mxu0
  %v584 = vpop.f32.mrb[0].mxu0
  %v585 = vadd.f32 0.0, %v584
  %v586 = vpop.f32.mrb[0].mxu0
  %587 = vmatprep.mubr.bf16.mxu0 0
  %588 = vmatmul.mubr.bf16.gmra.mrb[0].mxu0 %v462
  %v589 = vpop.f32.mrb[0].mxu0
  %v590 = vadd.f32 0.0, %v589
  %v591 = vpop.f32.mrb[0].mxu0
  %v592 = vpop.f32.mrb[0].mxu0
  %v593 = vadd.f32 0.0, %v592
  %v594 = vpop.f32.mrb[0].mxu0
  %595 = vmatprep.mubr.bf16.mxu0 0
  %596 = vmatmul.mubr.bf16.gmra.mrb[0].mxu0 %v463
  %v597 = vpop.f32.mrb[0].mxu0
  %v598 = vadd.f32 0.0, %v597
  %v599 = vpop.f32.mrb[0].mxu0
  %v600 = vpop.f32.mrb[0].mxu0
  %v601 = vadd.f32 0.0, %v600
  %v602 = vpop.f32.mrb[0].mxu0
  %603 = vmatprep.mubr.bf16.mxu0 0
  %604 = vmatmul.mubr.bf16.gmra.mrb[0].mxu0 %v464
  %v605 = vpop.f32.mrb[0].mxu0
  %v606 = vadd.f32 0.0, %v605
  %v607 = vpop.f32.mrb[0].mxu0
  %v608 = vpop.f32.mrb[0].mxu0
  %v609 = vadd.f32 0.0, %v608
  %v610 = vpop.f32.mrb[0].mxu0
  %611 = vmatprep.mubr.bf16.mxu0 0
  %612 = vmatmul.mubr.bf16.gmra.mrb[0].mxu0 %v465
  %v613 = vpop.f32.mrb[0].mxu0
  %v614 = vadd.f32 0.0, %v613
  %v615 = vpop.f32.mrb[0].mxu0
  %v616 = vpop.f32.mrb[0].mxu0
  %v617 = vadd.f32 0.0, %v616
  %v618 = vpop.f32.mrb[0].mxu0
  %619 = vmatprep.mubr.bf16.mxu0 0
  %620 = vmatmul.mubr.bf16.gmra.mrb[0].mxu0 %v466
  %v621 = vpop.f32.mrb[0].mxu0
  %v622 = vadd.f32 0.0, %v621
  %v623 = vpop.f32.mrb[0].mxu0
  %v624 = vpop.f32.mrb[0].mxu0
  %v625 = vadd.f32 0.0, %v624
  %v626 = vpop.f32.mrb[0].mxu0
  %627 = vdwg.mxu0
  %v628 = vpack.c.bf16 %v569, %v566
  %v629 = vpack.c.bf16 %v577, %v574
  %v630 = vpack.c.bf16 %v585, %v582
  %v631 = vpack.c.bf16 %v593, %v590
  %v632 = vpack.c.bf16 %v601, %v598
  %v633 = vpack.c.bf16 %v609, %v606
  %v634 = vpack.c.bf16 %v617, %v614
  %v635 = vpack.c.bf16 %v625, %v622
  %v636 = vld [vmem:[%s5] sm:$0x1]
  %v638 = vlaneseq
  %v639 = vshrl.u32 %v638, 7
  %v640 = vsub.s32 0, %v639
  %v641 = vrot.slane %v636, %v640
  %643 = vmatprep.subr.bf16.mxu0 0
  %644 = vmatpush1.bf16.msra.mxu0 %v628
  %645 = vmatprep.subr.bf16.mxu0 0
  %646 = vmatpush1.bf16.msra.mxu0 %v629
  %647 = vmatprep.subr.bf16.mxu0 0
  %648 = vmatpush1.bf16.msra.mxu0 %v630
  %649 = vmatprep.subr.bf16.mxu0 0
  %650 = vmatpush1.bf16.msra.mxu0 %v631
  %651 = vmatprep.subr.bf16.mxu0 0
  %652 = vmatpush1.bf16.msra.mxu0 %v632
  %653 = vmatprep.subr.bf16.mxu0 0
  %654 = vmatpush1.bf16.msra.mxu0 %v633
  %655 = vmatprep.subr.bf16.mxu0 0
  %656 = vmatpush1.bf16.msra.mxu0 %v634
  %657 = vmatprep.subr.bf16.mxu0 0
  %658 = vmatpush1.bf16.msra.mxu0 %v635
  %659 = vmatprep.subr.bf16.mxu0 0
  %660 = vmatpush1.bf16.msra.mxu0 0
  %661 = vmatprep.subr.bf16.mxu0 0
  %662 = vmatpush1.bf16.msra.mxu0 0
  %663 = vmatprep.subr.bf16.mxu0 0
  %664 = vmatpush1.bf16.msra.mxu0 0
  %665 = vmatprep.subr.bf16.mxu0 0
  %666 = vmatpush1.bf16.msra.mxu0 0
  %667 = vmatprep.subr.bf16.mxu0 0
  %668 = vmatpush1.bf16.msra.mxu0 0
  %669 = vmatprep.subr.bf16.mxu0 0
  %670 = vmatpush1.bf16.msra.mxu0 0
  %671 = vmatprep.subr.bf16.mxu0 0
  %672 = vmatpush1.bf16.msra.mxu0 0
  %673 = vmatprep.subr.bf16.mxu0 0
  %674 = vmatpush1.bf16.msra.mxu0 0
  %675 = vmatprep.mubr.bf16.mxu0 0
  %676 = vmatmul.mubr.bf16.gmra.mrb[0].mxu0 %v90
  %v677 = vpop.f32.mrb[0].mxu0
  %v678 = vadd.f32 %v641, %v677
  %v679 = vpop.f32.mrb[0].mxu0
  %v680 = vpop.f32.mrb[0].mxu0
  %v681 = vadd.f32 %v641, %v680
  %v682 = vpop.f32.mrb[0].mxu0
  %683 = vmatprep.mubr.bf16.mxu0 0
  %684 = vmatmul.mubr.bf16.gmra.mrb[0].mxu0 %v91
  %v685 = vpop.f32.mrb[0].mxu0
  %v686 = vadd.f32 %v641, %v685
  %v687 = vpop.f32.mrb[0].mxu0
  %v688 = vpop.f32.mrb[0].mxu0
  %v689 = vadd.f32 %v641, %v688
  %v690 = vpop.f32.mrb[0].mxu0
  %691 = vmatprep.mubr.bf16.mxu0 0
  %692 = vmatmul.mubr.bf16.gmra.mrb[0].mxu0 %v92
  %v693 = vpop.f32.mrb[0].mxu0
  %v694 = vadd.f32 %v641, %v693
  %v695 = vpop.f32.mrb[0].mxu0
  %v696 = vpop.f32.mrb[0].mxu0
  %v697 = vadd.f32 %v641, %v696
  %v698 = vpop.f32.mrb[0].mxu0
  %699 = vmatprep.mubr.bf16.mxu0 0
  %700 = vmatmul.mubr.bf16.gmra.mrb[0].mxu0 %v93
  %v701 = vpop.f32.mrb[0].mxu0
  %v702 = vadd.f32 %v641, %v701
  %v703 = vpop.f32.mrb[0].mxu0
  %v704 = vpop.f32.mrb[0].mxu0
  %v705 = vadd.f32 %v641, %v704
  %v706 = vpop.f32.mrb[0].mxu0
  %707 = vmatprep.mubr.bf16.mxu0 0
  %708 = vmatmul.mubr.bf16.gmra.mrb[0].mxu0 %v94
  %v709 = vpop.f32.mrb[0].mxu0
  %v710 = vadd.f32 %v641, %v709
  %v711 = vpop.f32.mrb[0].mxu0
  %v712 = vpop.f32.mrb[0].mxu0
  %v713 = vadd.f32 %v641, %v712
  %v714 = vpop.f32.mrb[0].mxu0
  %715 = vmatprep.mubr.bf16.mxu0 0
  %716 = vmatmul.mubr.bf16.gmra.mrb[0].mxu0 %v95
  %v717 = vpop.f32.mrb[0].mxu0
  %v718 = vadd.f32 %v641, %v717
  %v719 = vpop.f32.mrb[0].mxu0
  %v720 = vpop.f32.mrb[0].mxu0
  %v721 = vadd.f32 %v641, %v720
  %v722 = vpop.f32.mrb[0].mxu0
  %723 = vmatprep.mubr.bf16.mxu0 0
  %724 = vmatmul.mubr.bf16.gmra.mrb[0].mxu0 %v96
  %v725 = vpop.f32.mrb[0].mxu0
  %v726 = vadd.f32 %v641, %v725
  %v727 = vpop.f32.mrb[0].mxu0
  %v728 = vpop.f32.mrb[0].mxu0
  %v729 = vadd.f32 %v641, %v728
  %v730 = vpop.f32.mrb[0].mxu0
  %731 = vmatprep.mubr.bf16.mxu0 0
  %732 = vmatmul.mubr.bf16.gmra.mrb[0].mxu0 %v97
  %v733 = vpop.f32.mrb[0].mxu0
  %v734 = vadd.f32 %v641, %v733
  %v735 = vpop.f32.mrb[0].mxu0
  %v736 = vpop.f32.mrb[0].mxu0
  %v737 = vadd.f32 %v641, %v736
  %v738 = vpop.f32.mrb[0].mxu0
  %739 = vdwg.mxu0
  %740 = vst [vmem:[%s7] sm:$0xff] %v678
  %741 = vst [vmem:[%s7 + $0x8] sm:$0xff] %v681
  %742 = vst [vmem:[%s7 + $0x10] sm:$0xff] %v686
  %743 = vst [vmem:[%s7 + $0x18] sm:$0xff] %v689
  %744 = vst [vmem:[%s7 + $0x20] sm:$0xff] %v694
  %745 = vst [vmem:[%s7 + $0x28] sm:$0xff] %v697
  %746 = vst [vmem:[%s7 + $0x30] sm:$0xff] %v702
  %747 = vst [vmem:[%s7 + $0x38] sm:$0xff] %v705
  %748 = vst [vmem:[%s7 + $0x40] sm:$0xff] %v710
  %749 = vst [vmem:[%s7 + $0x48] sm:$0xff] %v713
  %750 = vst [vmem:[%s7 + $0x50] sm:$0xff] %v718
  %751 = vst [vmem:[%s7 + $0x58] sm:$0xff] %v721
  %752 = vst [vmem:[%s7 + $0x60] sm:$0xff] %v726
  %753 = vst [vmem:[%s7 + $0x68] sm:$0xff] %v729
  %754 = vst [vmem:[%s7 + $0x70] sm:$0xff] %v734
  %755 = vst [vmem:[%s7 + $0x78] sm:$0xff] %v737
  // Predicated region
  $region26: #{supreme_forward.1} parent=0 // pred_check
    _
  $region27: #{supreme_forward.1} parent=0 // pred_check_branch
    %757 = sbr.rel (0) target = $region29
  $region28: #{supreme_forward.1} parent=0 // pred_region
    _
  $region29: #{supreme_forward.1} parent=0 // pred_fallthru
    _
  // Predicated region
  $region30: #{supreme_forward.1} parent=0 // pred_check
    _
  $region31: #{supreme_forward.1} parent=0 // pred_check_branch
    %759 = sbr.rel (0) target = $region33
  $region32: #{supreme_forward.1} parent=0 // pred_region
    _
  $region33: #{supreme_forward.1} parent=0 // pred_fallthru
    _
  // Predicated region
  $region34: #{supreme_forward.1} parent=0 // pred_check
    _
  $region35: #{supreme_forward.1} parent=0 // pred_check_branch
    %761 = sbr.rel (0) target = $region37
  $region36: #{supreme_forward.1} parent=0 // pred_region
    _
  $region37: #{supreme_forward.1} parent=0 // pred_fallthru
    _
  // Predicated region
  $region38: #{supreme_forward.1} parent=0 // pred_check
    _
  $region39: #{supreme_forward.1} parent=0 // pred_check_branch
    %763 = sbr.rel (0) target = $region41
  $region40: #{supreme_forward.1} parent=0 // pred_region
    _
  $region41: #{supreme_forward.1} parent=0 // pred_fallthru
    _

</llo_original>
